<compile_context>
chip_gen: v5e
topology: v5e:2x2
jax: 0.10.0
libtpu: 0.0.40
codegen_flags: <defaults>
</compile_context>

<pallas_src>
import functools

import jax
import jax.numpy as jnp
from jax.experimental import pallas as pl
from jax.experimental.pallas import tpu as pltpu

_LANES = 128
# Up to (8192, 128) f32 tile = 4 MiB per input block; 2 inputs x 2 pipeline
# buffers = 16 MiB + a single (8,128) accumulator vreg.  vmem_limit_bytes is
# raised to 32 MiB below so this fits on v5e (default scoped 16 MiB) too and
# stays well under v7x's 64 MiB physical VMEM.
_MAX_BLOCK_ROWS = 8192
_VMEM_LIMIT_BYTES = 32 * 1024 * 1024
_EPS = 1e-8


def _l0_loss_kernel(gamma_ref, d_ref, t_ref, out_ref, acc_ref, *, tail_rows):
    i = pl.program_id(0)
    last = pl.num_programs(0) - 1

    @pl.when(i == 0)
    def _init():
        acc_ref[...] = jnp.zeros_like(acc_ref)
        out_ref[0, 0] = jnp.float32(0.0)

    rows, cols = d_ref.shape  # static block shape (block_rows, 128)

    gamma = gamma_ref[0]
    d = d_ref[...].astype(jnp.float32)
    t = t_ref[...].astype(jnp.float32)
    x = jnp.abs(d - t) + jnp.float32(_EPS)
    # x > 0 always, so x**gamma == exp(gamma * log(x)): 2 EUP transcendentals,
    # no generic pow fallback.
    val = jnp.exp(gamma * jnp.log(x))

    # Steady state: layout-preserving (rows//8, 8, 128) reshape + sum over the
    # leading axis = pure VPU tree adds into a single-vreg accumulator.
    @pl.when(i < last)
    def _steady():
        acc_ref[...] += val.reshape(rows // 8, 8, cols).sum(axis=0)

    # Last block: the block may be ragged (reads past the array return
    # unspecified values), so select the valid rows first.  Keep this a
    # jnp.where select -- a multiply-by-mask would propagate NaN/Inf garbage.
    @pl.when(i == last)
    def _finalize():
        row_ids = jax.lax.broadcasted_iota(jnp.int32, (rows, cols), 0)
        masked = jnp.where(row_ids < tail_rows, val, jnp.float32(0.0))
        acc_ref[...] += masked.reshape(rows // 8, 8, cols).sum(axis=0)
        out_ref[0, 0] = jnp.sum(acc_ref[...])


def _sublane_multiple(dtype) -> int:
    # 8 rows for 4-byte, 16 for 2-byte, 32 for 1-byte elements.
    return max(8, 32 // jnp.dtype(dtype).itemsize)


def l0_loss(denoised, target, gamma, tot_epochs, epoch):
    """Pallas TPU implementation of L0Loss.forward. Returns a scalar f32."""
    assert denoised.shape == target.shape

    # Scalar "schedule" math stays in plain JAX; shipped to SMEM via prefetch.
    new_gamma = jnp.asarray(
        gamma * (tot_epochs - epoch) / tot_epochs, dtype=jnp.float32
    )

    d = denoised.reshape(-1)
    t = target.reshape(-1)
    n = d.shape[0]

    sub = max(_sublane_multiple(d.dtype), _sublane_multiple(t.dtype))
    chunk = sub * _LANES
    prefix = (n // chunk) * chunk   # kernel covers this aligned prefix
    rem = n - prefix                # < chunk elements folded in with plain jnp

    total = jnp.float32(0.0)

    if prefix > 0:
        rows = prefix // _LANES
        if prefix == n:
            # Common case: pure reshape view, zero extra HBM traffic.
            dp = d.reshape(rows, _LANES)
            tp = t.reshape(rows, _LANES)
        else:
            # TODO(synk): the prefix slice still materializes a copy when the
            # length is unaligned; a manual-DMA path on the raw flat array
            # would remove it, but the aligned common case is already copy-free.
            dp = d[:prefix].reshape(rows, _LANES)
            tp = t[:prefix].reshape(rows, _LANES)

        block_rows = min(_MAX_BLOCK_ROWS, rows)
        nblocks = pl.cdiv(rows, block_rows)
        # Valid rows inside the (possibly ragged) last block; static int.
        tail_rows = rows - (nblocks - 1) * block_rows

        kernel = functools.partial(_l0_loss_kernel, tail_rows=tail_rows)

        part = pl.pallas_call(
            kernel,
            out_shape=jax.ShapeDtypeStruct((1, 1), jnp.float32),
            grid_spec=pltpu.PrefetchScalarGridSpec(
                num_scalar_prefetch=1,                      # new_gamma -> SMEM
                grid=(nblocks,),
                in_specs=[
                    pl.BlockSpec((block_rows, _LANES), lambda i, g: (i, 0)),
                    pl.BlockSpec((block_rows, _LANES), lambda i, g: (i, 0)),
                ],
                out_specs=pl.BlockSpec(memory_space=pltpu.SMEM),
                scratch_shapes=[pltpu.VMEM((8, _LANES), jnp.float32)],
            ),
            compiler_params=pltpu.CompilerParams(
                dimension_semantics=("arbitrary",),
                vmem_limit_bytes=_VMEM_LIMIT_BYTES,
            ),
        )(new_gamma.reshape((1,)), dp, tp)
        total = total + part[0, 0]

    if rem > 0:
        # Tiny remainder (< chunk elements): plain jnp, same math as the kernel.
        dr = d[prefix:].astype(jnp.float32)
        tr = t[prefix:].astype(jnp.float32)
        xr = jnp.abs(dr - tr) + jnp.float32(_EPS)
        total = total + jnp.sum(jnp.exp(new_gamma * jnp.log(xr)))

    return total / jnp.float32(n)


def _reference(denoised, target, gamma, tot_epochs, epoch):
    new_gamma = gamma * (tot_epochs - epoch) / tot_epochs
    loss = (jnp.abs(denoised.astype(jnp.float32) - target.astype(jnp.float32))
            + _EPS) ** new_gamma
    return jnp.mean(loss.reshape(-1)).astype(jnp.float32)


if __name__ == "__main__":
    key = jax.random.PRNGKey(0)
    k1, k2 = jax.random.split(key)

    # Small NCHW images, consistent with a denoising-loss use case.
    x_shape = (2, 4, 16, 16)
    denoised = jax.random.uniform(k1, x_shape, dtype=jnp.float32)
    target = jax.random.uniform(k2, x_shape, dtype=jnp.float32)

    gamma = 2.0
    tot_epochs = 50
    epoch = 10

    out = l0_loss(denoised, target, gamma, tot_epochs, epoch)
    jax.block_until_ready(out)

    ref = _reference(denoised, target, gamma, tot_epochs, epoch)
    assert jnp.allclose(out, ref, rtol=1e-5, atol=1e-6), (out, ref)

    print("KERNEL_OK")
</pallas_src>

<mosaic_0001>
module attributes {stable_mosaic.version = 11 : i64} {
  func.func @_l0_loss_kernel(%arg0: i32, %arg1: memref<1xf32, #tpu.memory_space<smem>>, %arg2: memref<16x128xf32, #tpu.memory_space<vmem>>, %arg3: memref<16x128xf32, #tpu.memory_space<vmem>>, %arg4: memref<1x1xf32, #tpu.memory_space<smem>>, %arg5: memref<8x128xf32, #tpu.memory_space<vmem>>) attributes {dimension_semantics = [#tpu.dimension_semantics<arbitrary>], iteration_bounds = array<i64: 1>, scalar_prefetch = 1 : i64, scratch_operands = 1 : i64, tpu.core_type = #tpu.core_type<tc>, window_params = [{transform_indices = @transform_0, window_bounds = array<i64: 16, 128>}, {transform_indices = @transform_1, window_bounds = array<i64: 16, 128>}, {transform_indices = @transform_2, window_bounds = array<i64: 1, 1>}]} {
    %c0_i32 = arith.constant 0 : i32
    %0 = arith.cmpi eq, %arg0, %c0_i32 : i32
    %1 = arith.extui %0 : i1 to i32
    %c0_i32_0 = arith.constant 0 : i32
    %2 = arith.cmpi ne, %1, %c0_i32_0 : i32
    scf.if %2 {
      %cst_9 = arith.constant 0.000000e+00 : f32
      %20 = vector.broadcast %cst_9 : f32 to vector<8x128xf32>
      %c0_10 = arith.constant 0 : index
      %c0_11 = arith.constant 0 : index
      %21 = vector.load %arg5[%c0_10, %c0_11] : memref<8x128xf32, #tpu.memory_space<vmem>>, vector<8x128xf32>
      tpu.vector_store %arg5[%c0_10, %c0_11], %20 {strides = array<i32>} : memref<8x128xf32, #tpu.memory_space<vmem>>, vector<8x128xf32>,
      %cst_12 = arith.constant 0.000000e+00 : f32
      %c0_13 = arith.constant 0 : index
      %c0_14 = arith.constant 0 : index
      %22 = memref.load %arg4[%c0_13, %c0_14] : memref<1x1xf32, #tpu.memory_space<smem>>
      memref.store %cst_12, %arg4[%c0_13, %c0_14] : memref<1x1xf32, #tpu.memory_space<smem>>
    } else {
    }
    %c0 = arith.constant 0 : index
    %3 = memref.load %arg1[%c0] : memref<1xf32, #tpu.memory_space<smem>>
    %c0_1 = arith.constant 0 : index
    %c0_2 = arith.constant 0 : index
    %4 = vector.load %arg2[%c0_1, %c0_2] : memref<16x128xf32, #tpu.memory_space<vmem>>, vector<16x128xf32>
    %c0_3 = arith.constant 0 : index
    %c0_4 = arith.constant 0 : index
    %5 = vector.load %arg3[%c0_3, %c0_4] : memref<16x128xf32, #tpu.memory_space<vmem>>, vector<16x128xf32>
    %6 = arith.subf %4, %5 : vector<16x128xf32>
    %7 = math.absf %6 : vector<16x128xf32>
    %cst = arith.constant 9.99999993E-9 : f32
    %8 = vector.broadcast %cst : f32 to vector<16x128xf32>
    %9 = arith.addf %7, %8 : vector<16x128xf32>
    %10 = math.log %9 : vector<16x128xf32>
    %11 = vector.broadcast %3 : f32 to vector<16x128xf32>
    %12 = arith.mulf %11, %10 : vector<16x128xf32>
    %13 = math.exp %12 : vector<16x128xf32>
    %c0_i32_5 = arith.constant 0 : i32
    %14 = arith.cmpi slt, %arg0, %c0_i32_5 : i32
    %15 = arith.extui %14 : i1 to i32
    %c0_i32_6 = arith.constant 0 : i32
    %16 = arith.cmpi ne, %15, %c0_i32_6 : i32
    scf.if %16 {
      %c0_9 = arith.constant 0 : index
      %c0_10 = arith.constant 0 : index
      %20 = vector.load %arg5[%c0_9, %c0_10] : memref<8x128xf32, #tpu.memory_space<vmem>>, vector<8x128xf32>
      %21 = vector.shape_cast %13 : vector<16x128xf32> to vector<2x8x128xf32>
      %cst_11 = arith.constant dense<0.000000e+00> : vector<8x128xf32>
      %22 = vector.multi_reduction <add>, %21, %cst_11 [0] : vector<2x8x128xf32> to vector<8x128xf32>
      %23 = arith.addf %20, %22 : vector<8x128xf32>
      %c0_12 = arith.constant 0 : index
      %c0_13 = arith.constant 0 : index
      %24 = vector.load %arg5[%c0_12, %c0_13] : memref<8x128xf32, #tpu.memory_space<vmem>>, vector<8x128xf32>
      tpu.vector_store %arg5[%c0_12, %c0_13], %23 {strides = array<i32>} : memref<8x128xf32, #tpu.memory_space<vmem>>, vector<8x128xf32>,
    } else {
    }
    %c0_i32_7 = arith.constant 0 : i32
    %17 = arith.cmpi eq, %arg0, %c0_i32_7 : i32
    %18 = arith.extui %17 : i1 to i32
    %c0_i32_8 = arith.constant 0 : i32
    %19 = arith.cmpi ne, %18, %c0_i32_8 : i32
    scf.if %19 {
      %20 = tpu.iota {dimensions = array<i32: 0>} : vector<16x128xi32>
      %c16_i32 = arith.constant 16 : i32
      %21 = vector.broadcast %c16_i32 : i32 to vector<16x128xi32>
      %22 = arith.cmpi slt, %20, %21 : vector<16x128xi32>
      %cst_9 = arith.constant 0.000000e+00 : f32
      %23 = vector.broadcast %cst_9 : f32 to vector<16x128xf32>
      %24 = arith.select %22, %13, %23 : vector<16x128xi1>, vector<16x128xf32>
      %c0_10 = arith.constant 0 : index
      %c0_11 = arith.constant 0 : index
      %25 = vector.load %arg5[%c0_10, %c0_11] : memref<8x128xf32, #tpu.memory_space<vmem>>, vector<8x128xf32>
      %26 = vector.shape_cast %24 : vector<16x128xf32> to vector<2x8x128xf32>
      %cst_12 = arith.constant dense<0.000000e+00> : vector<8x128xf32>
      %27 = vector.multi_reduction <add>, %26, %cst_12 [0] : vector<2x8x128xf32> to vector<8x128xf32>
      %28 = arith.addf %25, %27 : vector<8x128xf32>
      %c0_13 = arith.constant 0 : index
      %c0_14 = arith.constant 0 : index
      %29 = vector.load %arg5[%c0_13, %c0_14] : memref<8x128xf32, #tpu.memory_space<vmem>>, vector<8x128xf32>
      tpu.vector_store %arg5[%c0_13, %c0_14], %28 {strides = array<i32>} : memref<8x128xf32, #tpu.memory_space<vmem>>, vector<8x128xf32>,
      %c0_15 = arith.constant 0 : index
      %c0_16 = arith.constant 0 : index
      %30 = vector.load %arg5[%c0_15, %c0_16] : memref<8x128xf32, #tpu.memory_space<vmem>>, vector<8x128xf32>
      %31 = vector.shape_cast %30 : vector<8x128xf32> to vector<1x8x128xf32>
      %cst_17 = arith.constant dense<0.000000e+00> : vector<1xf32>
      %32 = vector.multi_reduction <add>, %31, %cst_17 [1, 2] : vector<1x8x128xf32> to vector<1xf32>
      %33 = vector.shape_cast %32 : vector<1xf32> to vector<1x1x1xf32>
      %34 = vector.extract %33[0, 0, 0] : f32 from vector<1x1x1xf32>
      %c0_18 = arith.constant 0 : index
      %c0_19 = arith.constant 0 : index
      %35 = memref.load %arg4[%c0_18, %c0_19] : memref<1x1xf32, #tpu.memory_space<smem>>
      memref.store %34, %arg4[%c0_18, %c0_19] : memref<1x1xf32, #tpu.memory_space<smem>>
    } else {
    }
    return
  }
  func.func @transform_0(%arg0: i32, %arg1: memref<1xf32, #tpu.memory_space<smem>>) -> (i32, i32) {
    %c0_i32 = arith.constant 0 : i32
    %c0_i32_0 = arith.constant 0 : i32
    return %arg0, %c0_i32 : i32, i32
  }
  func.func @transform_1(%arg0: i32, %arg1: memref<1xf32, #tpu.memory_space<smem>>) -> (i32, i32) {
    %c0_i32 = arith.constant 0 : i32
    %c0_i32_0 = arith.constant 0 : i32
    return %arg0, %c0_i32 : i32, i32
  }
  func.func @transform_2(%arg0: i32, %arg1: memref<1xf32, #tpu.memory_space<smem>>) -> (i32, i32) {
    %c0_i32 = arith.constant 0 : i32
    %c0_i32_0 = arith.constant 0 : i32
    %c0_i32_1 = arith.constant 0 : i32
    return %c0_i32, %c0_i32_0 : i32, i32
  }
}

</mosaic_0001>

<llo_original>
// kernel: tpu_custom_call.1
$region0: #{tpu_custom_call.1}
  #allocation0 [shape = 'u32[]', space=smem, size = 0x4, offset = 0x4, fixed_abs, tag = 'smem constant byte address 0x4 - core index']
  #allocation1 [shape = 'u32[72,128]{1,0:T(1,128)}', space=vmem, size = 0x9000, scoped, tag = 'internal scratch']
  #allocation2 [shape = 'f32[8,128]{1,0:T(8,128)}', space=vmem, size = 0x1000, scoped, tag = 'scratch operand']
  #allocation3 [shape = 's32[1]{0}', space=sflag, size = 0x4, scoped, tag = 'scoped memory for tpu_custom_call.1']
  #allocation4 [shape = 'f32[1]{0:T(128)S(6)}', space=smem, size = 0x200, scoped, tag = 'prefetched SMEM operand 0']
  %s0 = inlined_call_operand.<no memory space> [shape: f32[1], index: 0, kind: input, shape index: {}]
  %s1 = inlined_call_operand.hbm [shape: f32[16,128], index: 1, kind: input, shape index: {}]
  %s2 = inlined_call_operand.hbm [shape: f32[16,128], index: 2, kind: input, shape index: {}]
  %s3 = inlined_call_operand.hbm [shape: f32[1,1], index: 3, kind: output, shape index: {}]
  %s4 = sld [smem:[#allocation0]]
  $region38: #{tpu_custom_call.1} parent=0
    _
  %s6 = ssub.s32 1, %s4
  %s7 = scalar_select 0, %s6, %s4
  %8 = sst [smem:[#allocation4]] %s0
  $region1: #{tpu_custom_call.1} parent=0
    #allocation5 [shape = 'u8[8192]{0}', space=vmem, size = 0x2000, scoped, tag = 'input window, operand 1, single buffered']
    #allocation6 [shape = 's32[1]{0}', space=sflag, size = 0x4, scoped, tag = 'scoped memory for tpu_custom_call.1']
    #allocation7 [shape = 's32[1]{0}', space=sflag, size = 0x4, scoped, tag = 'scoped memory for tpu_custom_call.1']
    #allocation8 [shape = 'u8[8192]{0}', space=vmem, size = 0x2000, scoped, tag = 'input window, operand 2, single buffered']
    #allocation9 [shape = 's32[1]{0}', space=sflag, size = 0x4, scoped, tag = 'scoped memory for tpu_custom_call.1']
    #allocation10 [shape = 'u8[512]{0}', space=smem, size = 0x200, scoped, tag = 'output window, operand 0, single buffered']
    %9 = vsyncpa [#allocation6], 0
    %10 = vsyncpa [#allocation9], 0
    %11 = vsyncpa [#allocation7], 0
    // Predicated region
    $region2: #{tpu_custom_call.1} parent=1 // pred_check
      _
    $region3: #{tpu_custom_call.1} parent=1 // pred_check_branch
      %13 = sbr.rel (0) target = $region5
    $region4: #{tpu_custom_call.1} parent=1 // pred_region
      %15 = vsyncadd [#allocation6], 0
      %s16 = sshll.u32 %s1, 4
      %s17 = int_to_ptr.hbm [resolvable:$true] %s16
      %s18 = sshll.u32 [#allocation5], 4
      %s19 = int_to_ptr.vmem [resolvable:$true] %s18
      %24 = dma.hbm_to_vmem [thread:$0]  %s17, 256, %s19, [#allocation6], 128, 128, 8
    $region5: #{tpu_custom_call.1} parent=1 // pred_fallthru
      _
    // Predicated region
    $region6: #{tpu_custom_call.1} parent=1 // pred_check
      _
    $region7: #{tpu_custom_call.1} parent=1 // pred_check_branch
      %26 = sbr.rel (0) target = $region9
    $region8: #{tpu_custom_call.1} parent=1 // pred_region
      %28 = vsyncadd [#allocation9], 0
      %s29 = sshll.u32 %s2, 4
      %s30 = int_to_ptr.hbm [resolvable:$true] %s29
      %s31 = sshll.u32 [#allocation8], 4
      %s32 = int_to_ptr.vmem [resolvable:$true] %s31
      %37 = dma.hbm_to_vmem [thread:$0]  %s30, 256, %s32, [#allocation9], 128, 128, 8
    $region9: #{tpu_custom_call.1} parent=1 // pred_fallthru
      _
    // Predicated region
    $region10: #{tpu_custom_call.1} parent=1 // pred_check
      _
    $region11: #{tpu_custom_call.1} parent=1 // pred_check_branch
      %39 = sbr.rel (0) target = $region13
    $region12: #{tpu_custom_call.1} parent=1 // pred_region
      %41 = dma.done [#allocation6], 256
    $region13: #{tpu_custom_call.1} parent=1 // pred_fallthru
      _
    // Predicated region
    $region14: #{tpu_custom_call.1} parent=1 // pred_check
      _
    $region15: #{tpu_custom_call.1} parent=1 // pred_check_branch
      %43 = sbr.rel (0) target = $region17
    $region16: #{tpu_custom_call.1} parent=1 // pred_region
      %45 = dma.done [#allocation9], 256
    $region17: #{tpu_custom_call.1} parent=1 // pred_fallthru
      _
    %p46 = scmp.eq.s32.totalorder 0, 0
    // Predicated region
    $region18: #{tpu_custom_call.1} parent=1 // pred_check
      %p47 = pneg %p46
    $region19: #{tpu_custom_call.1} parent=1 // pred_check_branch
      %49 = sbr.rel (%p47) target = $region21
    $region20: #{tpu_custom_call.1} parent=1 // pred_region
      %50 = vst [vmem:[#allocation2] sm:$0xff] 0.0
      %s51 = scalar_lea.smem [#allocation10], 0
      %52 = sst [smem:[%s51]] 0.0
    $region21: #{tpu_custom_call.1} parent=1 // pred_fallthru
      _
    %s53 = sld [smem:[#allocation4]]
    %v54 = vld [vmem:[#allocation5] sm:$0xff]
    %v55 = vld [vmem:[#allocation5 + $0x8] sm:$0xff]
    %v56 = vld [vmem:[#allocation8] sm:$0xff]
    %v57 = vld [vmem:[#allocation8 + $0x8] sm:$0xff]
    %v58 = vsub.f32 %v54, %v56
    %v59 = vsub.f32 %v55, %v57
    %v60 = vand.u32 2147483647, %v58
    %v61 = vand.u32 2147483647, %v59
    %v62 = vadd.f32 %v60, 1e-08
    %v63 = vadd.f32 %v61, 1e-08
    %v64 = vlog2.pop %v62
    %v65 = vmul.f32 %v64, 0.6931472
    %v66 = vlog2.pop %v63
    %v67 = vmul.f32 %v66, 0.6931472
    %v68 = vstv %s53
    %v69 = vmul.f32 %v68, %v65
    %v70 = vmul.f32 %v68, %v67
    %v71 = vmul.f32 %v69, 1.442695
    %v72 = vpow.pop %v71
    %v73 = vmul.f32 %v70, 1.442695
    %v74 = vpow.pop %v73
    %p75 = scmp.lt.s32.totalorder 0, 0
    // Predicated region
    $region22: #{tpu_custom_call.1} parent=1 // pred_check
      %p76 = pneg %p75
    $region23: #{tpu_custom_call.1} parent=1 // pred_check_branch
      %78 = sbr.rel (%p76) target = $region25
    $region24: #{tpu_custom_call.1} parent=1 // pred_region
      %v79 = vld [vmem:[#allocation2] sm:$0xff]
      %v80 = vadd.f32 %v72, %v74
      %v81 = vadd.f32 %v79, %v80
      %82 = vst [vmem:[#allocation2] sm:$0xff] %v81
    $region25: #{tpu_custom_call.1} parent=1 // pred_fallthru
      _
    // Predicated region
    $region26: #{tpu_custom_call.1} parent=1 // pred_check
      %p83 = pneg %p46
    $region27: #{tpu_custom_call.1} parent=1 // pred_check_branch
      %85 = sbr.rel (%p83) target = $region29
    $region28: #{tpu_custom_call.1} parent=1 // pred_region
      %v86 = vlaneseq
      %v87 = vshrl.u32 %v86, 7
      %v88 = vadd.s32 %v87, 8
      %vm89 = vcmp.lt.s32.totalorder %v87, 16
      %vm90 = vcmp.lt.s32.totalorder %v88, 16
      %v91 = vsel %vm89, %v72, 0.0
      %v92 = vsel %vm90, %v74, 0.0
      %v93 = vld [vmem:[#allocation2] sm:$0xff]
      %v94 = vadd.f32 %v91, %v92
      %v95 = vadd.f32 %v93, %v94
      %96 = vst [vmem:[#allocation2] sm:$0xff] %v95
      %v97 = vld [vmem:[#allocation2] sm:$0xff]
      %98 = vadd.xlane.f32.xlu0 %v97
      %v99 = vpop.xlane.xlu0 %98
      %v100 = vrot.slane %v99, 4
      %v101 = vadd.f32 %v99, %v100
      %v102 = vrot.slane %v101, 2
      %v103 = vadd.f32 %v101, %v102
      %v104 = vrot.slane %v103, 1
      %v105 = vadd.f32 %v103, %v104
      %s106 = vtos %v105
      %s107 = scalar_lea.smem [#allocation10], 0
      %108 = sst [smem:[%s107]] %s106
    $region29: #{tpu_custom_call.1} parent=1 // pred_fallthru
      _
    // Predicated region
    $region30: #{tpu_custom_call.1} parent=1 // pred_check
      _
    $region31: #{tpu_custom_call.1} parent=1 // pred_check_branch
      %110 = sbr.rel (0) target = $region33
    $region32: #{tpu_custom_call.1} parent=1 // pred_region
      %112 = vsyncadd [#allocation7], 0
      %s114 = sshll.u32 %s3, 4
      %s115 = int_to_ptr.hbm [resolvable:$true] %s114
      %117 = dma.smem_to_hbm [#allocation10], 16, %s115, [#allocation7]
    $region33: #{tpu_custom_call.1} parent=1 // pred_fallthru
      _
    // Predicated region
    $region34: #{tpu_custom_call.1} parent=1 // pred_check
      _
    $region35: #{tpu_custom_call.1} parent=1 // pred_check_branch
      %119 = sbr.rel (0) target = $region37
    $region36: #{tpu_custom_call.1} parent=1 // pred_region
      %121 = dma.done [#allocation7], 16
    $region37: #{tpu_custom_call.1} parent=1 // pred_fallthru
      _
    %122 = sfence
    %123 = vsyncpa [#allocation6], 1
    %124 = vsyncpa [#allocation9], 1
    %125 = vsyncpa [#allocation7], 1

</llo_original>
